<compile_context>
chip_gen: v5e
topology: v5e:2x2
jax: 0.10.0
libtpu: 0.0.40
codegen_flags: <defaults>
</compile_context>

<pallas_src>
import jax
import jax.numpy as jnp
from jax.experimental import pallas as pl
from jax.experimental.pallas import tpu as pltpu


def covariance_svd_kernel(row_ref, col_ref, w_ref, b_ref, sigma_ref, out_ref):
    tb = row_ref.shape[0]
    # One fused MXU matmul with the shared weight RHS: 2*TILE_B LHS rows.
    lhs = jnp.concatenate([row_ref[...], col_ref[...]], axis=0)
    uv = jnp.dot(lhs, w_ref[...], preferred_element_type=jnp.float32)
    uv = uv + b_ref[...]                    # bias add in f32
    u, ut = uv[:tb, :], uv[tb:, :]
    # y_hat = sum_k sigma_k * u_k * uT_k   -> (TILE_B, 1), all f32
    out_ref[...] = jnp.sum(sigma_ref[...] * u * ut, axis=1, keepdims=True)


def prepare_params(weight, bias, sigma, compute_dtype=jnp.float32):
    """One-time parameter prep (keep this out of the per-call path).

    weight: (n_components, n_input) -> pre-transposed (n_input, n_components)
    in compute_dtype (bf16 recommended on v6e/v7x); bias / sigma stay f32.
    """
    w_t = jnp.asarray(weight).T.astype(compute_dtype)            # (n_in, n_c)
    b2 = jnp.asarray(bias, dtype=jnp.float32).reshape(1, -1)     # (1, n_c)
    s2 = jnp.asarray(sigma, dtype=jnp.float32).reshape(1, -1)    # (1, n_c)
    return w_t, b2, s2


def _round_up(x, m):
    return ((x + m - 1) // m) * m


def covariance_svd_forward(row, col, w_t, b2, s2, *, tile_b=None):
    """row, col: (B, n_input); w_t: (n_input, n_components) pre-transposed;
    b2, s2: (1, n_components) f32. Returns (B,) float32."""
    B, n_input = row.shape
    n_components = w_t.shape[1]
    compute_dtype = w_t.dtype

    row = row.astype(compute_dtype)
    col = col.astype(compute_dtype)

    itemsize = jnp.dtype(compute_dtype).itemsize
    if tile_b is None:
        # Budget ~8 MiB for the double-buffered row/col input tiles
        # (2 arrays x 2 buffers x TILE_B x n_input x itemsize), comfortably
        # inside a 32 MiB scoped VMEM limit on every generation (v7x included).
        budget = 8 * 1024 * 1024
        tile_b = budget // (2 * 2 * n_input * itemsize)
    tile_b = max(16, (int(tile_b) // 16) * 16)        # multiple of 16 sublanes
    tile_b = min(tile_b, _round_up(B, 16))            # don't exceed the batch

    b_pad = _round_up(B, tile_b)
    if b_pad != B:
        pad = b_pad - B
        row = jnp.pad(row, ((0, pad), (0, 0)))
        col = jnp.pad(col, ((0, pad), (0, 0)))

    grid = (b_pad // tile_b,)

    out = pl.pallas_call(
        covariance_svd_kernel,
        out_shape=jax.ShapeDtypeStruct((b_pad, 1), jnp.float32),
        grid_spec=pltpu.PrefetchScalarGridSpec(
            num_scalar_prefetch=0,
            grid=grid,
            in_specs=[
                pl.BlockSpec((tile_b, n_input), lambda i: (i, 0)),          # row
                pl.BlockSpec((tile_b, n_input), lambda i: (i, 0)),          # col
                pl.BlockSpec((n_input, n_components), lambda i: (0, 0)),    # W^T
                pl.BlockSpec((1, n_components), lambda i: (0, 0)),          # bias
                pl.BlockSpec((1, n_components), lambda i: (0, 0)),          # sigma
            ],
            out_specs=pl.BlockSpec((tile_b, 1), lambda i: (i, 0)),
        ),
        compiler_params=pltpu.CompilerParams(
            dimension_semantics=("parallel",),
            vmem_limit_bytes=32 * 1024 * 1024,
        ),
    )(row, col, w_t, b2, s2)

    return out[:B, 0]


if __name__ == "__main__":
    # Small, deterministic synthetic setup consistent with the module:
    #   n_input = 32, n_components = 8, batch B = 16
    B, n_input, n_components = 16, 32, 8

    key = jax.random.PRNGKey(0)
    k_row, k_col, k_w, k_b = jax.random.split(key, 4)

    row = jax.random.normal(k_row, (B, n_input), dtype=jnp.float32)
    col = jax.random.normal(k_col, (B, n_input), dtype=jnp.float32)

    # Deterministic parameter init (PyTorch-Linear-like uniform bound).
    bound = 1.0 / jnp.sqrt(n_input)
    weight = jax.random.uniform(k_w, (n_components, n_input),
                                dtype=jnp.float32, minval=-bound, maxval=bound)
    bias = jax.random.uniform(k_b, (n_components,),
                              dtype=jnp.float32, minval=-bound, maxval=bound)
    sigma = jnp.ones((n_components,), dtype=jnp.float32)  # torch.ones init

    # Pure-JAX reference.
    u_ref = row @ weight.T + bias
    uT_ref = col @ weight.T + bias
    y_ref = jnp.sum(sigma * u_ref * uT_ref, axis=1)

    # f32 compute path (exact-tolerance check, v5e-friendly).
    params_f32 = prepare_params(weight, bias, sigma, compute_dtype=jnp.float32)
    y_f32 = jax.block_until_ready(covariance_svd_forward(row, col, *params_f32))
    assert y_f32.shape == (B,)
    assert jnp.allclose(y_f32, y_ref, atol=1e-5, rtol=1e-5)

    # bf16 MXU path (native dtype on v6e/v7x); f32 accumulation + epilogue.
    params_bf16 = prepare_params(weight, bias, sigma, compute_dtype=jnp.bfloat16)
    y_bf16 = jax.block_until_ready(covariance_svd_forward(row, col, *params_bf16))
    assert y_bf16.shape == (B,)
    assert jnp.allclose(y_bf16, y_ref, atol=1.5e-1, rtol=5e-2)

    print("KERNEL_OK")
</pallas_src>

<mosaic_0001>
module attributes {stable_mosaic.version = 11 : i64} {
  func.func @covariance_svd_kernel(%arg0: i32, %arg1: memref<16x32xf32, #tpu.memory_space<vmem>>, %arg2: memref<16x32xf32, #tpu.memory_space<vmem>>, %arg3: memref<32x8xf32, #tpu.memory_space<vmem>>, %arg4: memref<1x8xf32, #tpu.memory_space<vmem>>, %arg5: memref<1x8xf32, #tpu.memory_space<vmem>>, %arg6: memref<16x1xf32, #tpu.memory_space<vmem>>) attributes {dimension_semantics = [#tpu.dimension_semantics<parallel>], iteration_bounds = array<i64: 1>, scalar_prefetch = 0 : i64, scratch_operands = 0 : i64, tpu.core_type = #tpu.core_type<tc>, window_params = [{transform_indices = @transform_0, window_bounds = array<i64: 16, 32>}, {transform_indices = @transform_1, window_bounds = array<i64: 16, 32>}, {pipeline_mode = #tpu.pipeline_mode<synchronous>, transform_indices = @transform_2, window_bounds = array<i64: 32, 8>}, {pipeline_mode = #tpu.pipeline_mode<synchronous>, transform_indices = @transform_3, window_bounds = array<i64: 1, 8>}, {pipeline_mode = #tpu.pipeline_mode<synchronous>, transform_indices = @transform_4, window_bounds = array<i64: 1, 8>}, {transform_indices = @transform_5, window_bounds = array<i64: 16, 1>}]} {
    %c0 = arith.constant 0 : index
    %c0_0 = arith.constant 0 : index
    %0 = vector.load %arg1[%c0, %c0_0] : memref<16x32xf32, #tpu.memory_space<vmem>>, vector<16x32xf32>
    %c0_1 = arith.constant 0 : index
    %c0_2 = arith.constant 0 : index
    %1 = vector.load %arg2[%c0_1, %c0_2] : memref<16x32xf32, #tpu.memory_space<vmem>>, vector<16x32xf32>
    %2 = tpu.concatenate %0, %1 in 0 : vector<16x32xf32>, vector<16x32xf32> -> vector<32x32xf32>
    %c0_3 = arith.constant 0 : index
    %c0_4 = arith.constant 0 : index
    %3 = vector.load %arg3[%c0_3, %c0_4] : memref<32x8xf32, #tpu.memory_space<vmem>>, vector<32x8xf32>
    %cst = arith.constant dense<0.000000e+00> : vector<32x8xf32>
    %4 = tpu.matmul %2, %3, %cst {dimension_numbers = #tpu.dot_dimension_numbers<[1], [0], [0], [1], [0, 0, 1, 1], [], []>} : vector<32x32xf32>, vector<32x8xf32>, vector<32x8xf32> -> vector<32x8xf32>
    %c0_5 = arith.constant 0 : index
    %c0_6 = arith.constant 0 : index
    %5 = vector.load %arg4[%c0_5, %c0_6] : memref<1x8xf32, #tpu.memory_space<vmem>>, vector<1x8xf32>
    %6 = vector.broadcast %5 : vector<1x8xf32> to vector<32x8xf32>
    %7 = arith.addf %4, %6 : vector<32x8xf32>
    %8 = vector.extract_strided_slice %7 {offsets = [0, 0], sizes = [16, 8], strides = [1, 1]} : vector<32x8xf32> to vector<16x8xf32>
    %9 = vector.extract_strided_slice %7 {offsets = [16, 0], sizes = [16, 8], strides = [1, 1]} : vector<32x8xf32> to vector<16x8xf32>
    %c0_7 = arith.constant 0 : index
    %c0_8 = arith.constant 0 : index
    %10 = vector.load %arg5[%c0_7, %c0_8] : memref<1x8xf32, #tpu.memory_space<vmem>>, vector<1x8xf32>
    %11 = vector.broadcast %10 : vector<1x8xf32> to vector<16x8xf32>
    %12 = arith.mulf %11, %8 : vector<16x8xf32>
    %13 = arith.mulf %12, %9 : vector<16x8xf32>
    %cst_9 = arith.constant dense<0.000000e+00> : vector<16xf32>
    %14 = vector.multi_reduction <add>, %13, %cst_9 [1] : vector<16x8xf32> to vector<16xf32>
    %15 = vector.shape_cast %14 : vector<16xf32> to vector<16x1xf32>
    %c0_10 = arith.constant 0 : index
    %c0_11 = arith.constant 0 : index
    %16 = vector.load %arg6[%c0_10, %c0_11] : memref<16x1xf32, #tpu.memory_space<vmem>>, vector<16x1xf32>
    tpu.vector_store %arg6[%c0_10, %c0_11], %15 {strides = array<i32>} : memref<16x1xf32, #tpu.memory_space<vmem>>, vector<16x1xf32>,
    return
  }
  func.func @transform_0(%arg0: i32) -> (i32, i32) {
    %c0_i32 = arith.constant 0 : i32
    %c0_i32_0 = arith.constant 0 : i32
    return %arg0, %c0_i32 : i32, i32
  }
  func.func @transform_1(%arg0: i32) -> (i32, i32) {
    %c0_i32 = arith.constant 0 : i32
    %c0_i32_0 = arith.constant 0 : i32
    return %arg0, %c0_i32 : i32, i32
  }
  func.func @transform_2(%arg0: i32) -> (i32, i32) {
    %c0_i32 = arith.constant 0 : i32
    %c0_i32_0 = arith.constant 0 : i32
    %c0_i32_1 = arith.constant 0 : i32
    return %c0_i32, %c0_i32_0 : i32, i32
  }
  func.func @transform_3(%arg0: i32) -> (i32, i32) {
    %c0_i32 = arith.constant 0 : i32
    %c0_i32_0 = arith.constant 0 : i32
    %c0_i32_1 = arith.constant 0 : i32
    return %c0_i32, %c0_i32_0 : i32, i32
  }
  func.func @transform_4(%arg0: i32) -> (i32, i32) {
    %c0_i32 = arith.constant 0 : i32
    %c0_i32_0 = arith.constant 0 : i32
    %c0_i32_1 = arith.constant 0 : i32
    return %c0_i32, %c0_i32_0 : i32, i32
  }
  func.func @transform_5(%arg0: i32) -> (i32, i32) {
    %c0_i32 = arith.constant 0 : i32
    %c0_i32_0 = arith.constant 0 : i32
    return %arg0, %c0_i32 : i32, i32
  }
}

</mosaic_0001>

<llo_original>
// kernel: tpu_custom_call.1
$region0: #{tpu_custom_call.1}
  #allocation0 [shape = 'u32[]', space=smem, size = 0x4, offset = 0x4, fixed_abs, tag = 'smem constant byte address 0x4 - core index']
  #allocation1 [shape = 'u32[72,128]{1,0:T(1,128)}', space=vmem, size = 0x9000, scoped, tag = 'internal scratch']
  %s0 = inlined_call_operand.vmem [shape: f32[16,32], index: 0, kind: input, shape index: {}]
  %s1 = inlined_call_operand.vmem [shape: f32[16,32], index: 1, kind: input, shape index: {}]
  %s2 = inlined_call_operand.vmem [shape: f32[32,8], index: 2, kind: input, shape index: {}]
  %s3 = inlined_call_operand.vmem [shape: f32[1,8], index: 3, kind: input, shape index: {}]
  %s4 = inlined_call_operand.vmem [shape: f32[1,8], index: 4, kind: input, shape index: {}]
  %s5 = inlined_call_operand.vmem [shape: f32[16,1], index: 5, kind: output, shape index: {}]
  %s6 = sld [smem:[#allocation0]]
  $region30: #{tpu_custom_call.1} parent=0
    _
  %s8 = ssub.s32 1, %s6
  %s9 = scalar_select 0, %s8, %s6
  // Predicated region
  $region2: #{tpu_custom_call.1} parent=0 // pred_check
    _
  $region3: #{tpu_custom_call.1} parent=0 // pred_check_branch
    %11 = sbr.rel (0) target = $region5
  $region4: #{tpu_custom_call.1} parent=0 // pred_region
    _
  $region5: #{tpu_custom_call.1} parent=0 // pred_fallthru
    _
  // Predicated region
  $region6: #{tpu_custom_call.1} parent=0 // pred_check
    _
  $region7: #{tpu_custom_call.1} parent=0 // pred_check_branch
    %13 = sbr.rel (0) target = $region9
  $region8: #{tpu_custom_call.1} parent=0 // pred_region
    _
  $region9: #{tpu_custom_call.1} parent=0 // pred_fallthru
    _
  // Predicated region
  $region10: #{tpu_custom_call.1} parent=0 // pred_check
    _
  $region11: #{tpu_custom_call.1} parent=0 // pred_check_branch
    %15 = sbr.rel (0) target = $region13
  $region12: #{tpu_custom_call.1} parent=0 // pred_region
    _
  $region13: #{tpu_custom_call.1} parent=0 // pred_fallthru
    _
  // Predicated region
  $region14: #{tpu_custom_call.1} parent=0 // pred_check
    _
  $region15: #{tpu_custom_call.1} parent=0 // pred_check_branch
    %17 = sbr.rel (0) target = $region17
  $region16: #{tpu_custom_call.1} parent=0 // pred_region
    _
  $region17: #{tpu_custom_call.1} parent=0 // pred_fallthru
    _
  // Predicated region
  $region18: #{tpu_custom_call.1} parent=0 // pred_check
    _
  $region19: #{tpu_custom_call.1} parent=0 // pred_check_branch
    %19 = sbr.rel (0) target = $region21
  $region20: #{tpu_custom_call.1} parent=0 // pred_region
    _
  $region21: #{tpu_custom_call.1} parent=0 // pred_fallthru
    _
  %v20 = vld [vmem:[%s0] sm:$0xff]
  %v21 = vld [vmem:[%s0 + $0x8] sm:$0xff]
  %v22 = vld [vmem:[%s1] sm:$0xff]
  %v23 = vld [vmem:[%s1 + $0x8] sm:$0xff]
  %v24 = vld [vmem:[%s2] sm:$0xff]
  %v25 = vld [vmem:[%s2 + $0x8] sm:$0xff]
  %v26 = vld [vmem:[%s2 + $0x10] sm:$0xff]
  %v27 = vld [vmem:[%s2 + $0x18] sm:$0xff]
  %v28 = vld [vmem:[%s3] sm:$0x1]
  %v30 = vperm.slane %v28, 0
  %vm32 = vcmask 261120
  %v34 = vsel %vm32, %v20, 0
  %v37 = vsel %vm32, %v21, 0
  %v40 = vsel %vm32, %v22, 0
  %v43 = vsel %vm32, %v23, 0
  %45 = vmatpush.msra.mxu0 0.0
  %46 = vmatpush.msra.mxu0 0.0
  %47 = vmatpush.msra.mxu0 0.0
  %48 = vmatpush.msra.mxu0 0.0
  %49 = vmatpush.msra.mxu0 0.0
  %50 = vmatpush.msra.mxu0 0.0
  %51 = vmatpush.msra.mxu0 0.0
  %52 = vmatpush.msra.mxu0 0.0
  %53 = vmatpush.msra.mxu0 0.0
  %54 = vmatpush.msra.mxu0 0.0
  %55 = vmatpush.msra.mxu0 0.0
  %56 = vmatpush.msra.mxu0 0.0
  %57 = vmatpush.msra.mxu0 %v27
  %58 = vmatpush.msra.mxu0 %v26
  %59 = vmatpush.msra.mxu0 %v25
  %60 = vmatpush.msra.mxu0 %v24
  %61 = vmatmul.f32.gmra.mxu0 %v34
  %v62 = vpop.f32.mrf.mxu0
  %v63 = vadd.f32 %v30, %v62
  %64 = vmatmul.f32.gmra.mxu0 %v37
  %v65 = vpop.f32.mrf.mxu0
  %v66 = vadd.f32 %v30, %v65
  %67 = vmatmul.f32.gmra.mxu0 %v40
  %v68 = vpop.f32.mrf.mxu0
  %v69 = vadd.f32 %v30, %v68
  %70 = vmatmul.f32.gmra.mxu0 %v43
  %v71 = vpop.f32.mrf.mxu0
  %v72 = vadd.f32 %v30, %v71
  %73 = vdwg.mxu0
  %v74 = vld [vmem:[%s4] sm:$0x1]
  %v76 = vperm.slane %v74, 0
  %v78 = vmul.f32 %v76, %v63
  %v79 = vmul.f32 %v76, %v66
  %v80 = vmul.f32 %v78, %v69
  %v81 = vmul.f32 %v79, %v72
  %vm82 = vcmask 64512
  %v83 = vsel %vm82, %v80, 0.0
  %84 = vadd.xlane.f32.xlu0 %v83
  %v85 = vpop.xlane.xlu0 %84
  %v86 = vsel %vm82, %v81, 0.0
  %87 = vadd.xlane.f32.xlu0 %v86
  %v88 = vpop.xlane.xlu0 %87
  %vm89 = vcmask 7168
  %90 = vst.msk [vmem:[%s5] sm:$0xff] %vm89, %v85
  %91 = vst.msk [vmem:[%s5 + $0x8] sm:$0xff] %vm89, %v88
  // Predicated region
  $region22: #{tpu_custom_call.1} parent=0 // pred_check
    _
  $region23: #{tpu_custom_call.1} parent=0 // pred_check_branch
    %93 = sbr.rel (0) target = $region25
  $region24: #{tpu_custom_call.1} parent=0 // pred_region
    _
  $region25: #{tpu_custom_call.1} parent=0 // pred_fallthru
    _
  // Predicated region
  $region26: #{tpu_custom_call.1} parent=0 // pred_check
    _
  $region27: #{tpu_custom_call.1} parent=0 // pred_check_branch
    %95 = sbr.rel (0) target = $region29
  $region28: #{tpu_custom_call.1} parent=0 // pred_region
    _
  $region29: #{tpu_custom_call.1} parent=0 // pred_fallthru
    _

</llo_original>
